<compile_context>
chip_gen: v6e
topology: v6e:2x2x1
jax: 0.10.0
libtpu: 0.0.40
codegen_flags: <defaults>
</compile_context>

<pallas_src>
import functools

import jax
import jax.numpy as jnp
from jax.experimental import pallas as pl
from jax.experimental.pallas import tpu as pltpu


_LANE = 128
_SUBLANE = 8
_MAX_TILE_M = 2048


def _round_up(x, m):
    return ((x + m - 1) // m) * m


def _cdiv(a, b):
    return -(-a // b)


def _vmem_limits():
    """(vmem_limit_bytes, per-step tile working-set budget) for this chip."""
    cap = 64 * 1024 * 1024  # conservative default == v7x per-TC VMEM
    try:
        cap = int(pltpu.get_tpu_info().vmem_capacity_bytes)
    except Exception:
        pass
    if cap <= 64 * 1024 * 1024:
        # v7x: 64 MiB VMEM per TensorCore -- stay well under it.
        limit = 40 * 1024 * 1024
    else:
        # v5e / v6e: 128 MiB physical VMEM; vmem_limit_bytes overrides the
        # small scoped default, so use most of it for bigger M tiles.
        limit = 88 * 1024 * 1024
    budget = limit - 8 * 1024 * 1024  # headroom for Mosaic internal scratch
    return limit, budget


def _choose_tile_k(cin, override=None):
    # K-tile only when the tile divides Cin exactly (a padded partial-K block
    # would feed garbage into the accumulator) and is a lane multiple.
    if override is not None:
        tk = int(override)
        if tk < cin and cin % tk == 0 and tk % _LANE == 0:
            return tk
        return cin
    if cin > 2048:
        # 256-multiples keep the 2x256x256 MXUs on v6e/v7x fully fed.
        for tk in (2048, 1024, 512, 256):
            if cin % tk == 0:
                return tk
    return cin


def _choose_tile_n(n_out, tile_k, in_itemsize, budget):
    # Bound the double-buffered (tile_k, tile_n) weight block to ~1/3 of the
    # budget so tile_m stays large.  Ragged (non-128-multiple) n_out is only
    # used when the full-width weight strip is known to fit.
    if n_out % _LANE != 0:
        return n_out
    w_budget = budget // 3
    if 2 * tile_k * n_out * in_itemsize <= w_budget:
        return n_out
    tn = w_budget // (2 * tile_k * in_itemsize)
    tn = max(_LANE, (tn // _LANE) * _LANE)
    return min(n_out, tn)


def _choose_tile_m(m, tile_k, tile_n, in_itemsize, out_itemsize, use_acc, budget):
    # Double-buffered x / w / out blocks (+ resident f32 accumulator if K is
    # tiled), dtype-aware.
    w_bytes = 2 * tile_k * tile_n * in_itemsize
    avail = budget - w_bytes
    denom = 2 * tile_k * in_itemsize + 2 * tile_n * out_itemsize
    if use_acc:
        denom += 4 * tile_n
    tm = max(_SUBLANE, avail // denom) if avail > 0 else _SUBLANE
    tm = min(tm, _MAX_TILE_M)
    # Give both v7x TensorCores an M tile for mid-sized M (grid_M >= 2).
    if m >= 2 * _LANE:
        tm = min(tm, _round_up(_cdiv(m, 2), _LANE))
    if m >= _LANE:
        tm = min(tm, _round_up(m, _LANE))
        tm = max(_LANE, (tm // _LANE) * _LANE)  # keep MXU pushes full
    else:
        tm = min(tm, _round_up(m, _SUBLANE))
        tm = max(_SUBLANE, (tm // _SUBLANE) * _SUBLANE)
    return int(tm)


def _np_block_relu_kernel_single_k(x_ref, w_ref, o_ref):
    # x_ref: (tm, Cin), w_ref: (Cin, tn), o_ref: (tm, tn).  Single K step:
    # no accumulator scratch, no extra VMEM passes through the vst slot.
    o_ref[...] = jnp.maximum(
        jnp.dot(x_ref[...], w_ref[...], preferred_element_type=jnp.float32),
        0.0,
    ).astype(o_ref.dtype)


def _np_block_relu_kernel_multi_k(x_ref, w_ref, o_ref, acc_ref):
    # x_ref: (tm, tk), w_ref: (tk, tn), o_ref/acc_ref: (tm, tn).
    k = pl.program_id(2)

    @pl.when(k == 0)
    def _():
        acc_ref[...] = jnp.zeros_like(acc_ref)

    acc_ref[...] += jnp.dot(x_ref[...], w_ref[...],
                            preferred_element_type=jnp.float32)

    @pl.when(k == pl.num_programs(2) - 1)
    def _():
        o_ref[...] = jnp.maximum(acc_ref[...], 0.0).astype(o_ref.dtype)


@functools.partial(jax.jit, static_argnames=("tile_m", "tile_k"))
def np_block_relu2d(x, weight, tile_m=None, tile_k=None):
    """NPBlockRelu2d forward (dropout=0, batchnorm=False, bias=False).

    x: (B, S, Cin); weight: (Cout, Cin) like nn.Linear.weight.
    Returns ReLU(x @ weight.T): (B, S, Cout) with x.dtype.
    """
    B, S, Cin = x.shape
    Cout, Cin_w = weight.shape
    if Cin_w != Cin:
        raise ValueError(f"weight shape {weight.shape} incompatible with x {x.shape}")
    M = B * S
    out_dtype = x.dtype
    in_itemsize = jnp.dtype(x.dtype).itemsize
    out_itemsize = jnp.dtype(out_dtype).itemsize

    vmem_limit, budget = _vmem_limits()

    tk = _choose_tile_k(Cin, tile_k)

    # Output-width decision: pad Cout to a lane multiple (lane-dense unmasked
    # stores) only when the padding overhead is small; for small ragged Cout,
    # store the exact width (masked stores) and skip the post-kernel slice.
    Cout_p = _round_up(Cout, _LANE)
    unpadded = (
        Cout_p != Cout
        and Cout_p * 8 > Cout * 9                        # >12.5% lane padding
        and 2 * tk * Cout * in_itemsize <= budget // 3   # weight strip fits un-tiled
    )
    Nout = Cout if unpadded else Cout_p

    tn = _choose_tile_n(Nout, tk, in_itemsize, budget)
    grid_k = _cdiv(Cin, tk)
    use_acc = grid_k > 1

    if tile_m is None:
        tm = _choose_tile_m(M, tk, tn, in_itemsize, out_itemsize, use_acc, budget)
    else:
        tm = max(_SUBLANE, _round_up(int(tile_m), _SUBLANE))

    x2d = x.reshape(M, Cin)                       # free relayout for contiguous x
    w_t = weight.T.astype(x.dtype)                # (Cin, Cout); weight is small
    if Nout != Cout:
        # Zero weight columns -> ReLU(x @ 0) == 0 in the padded outputs.
        w_t = jnp.pad(w_t, ((0, 0), (0, Nout - Cout)))

    grid_m = _cdiv(M, tm)
    grid_n = _cdiv(Nout, tn)

    if not use_acc:
        grid = (grid_m, grid_n)
        in_specs = [
            pl.BlockSpec((tm, Cin), lambda i, j: (i, 0)),
            pl.BlockSpec((Cin, tn), lambda i, j: (0, j)),
        ]
        out_specs = pl.BlockSpec((tm, tn), lambda i, j: (i, j))
        scratch_shapes = []
        kernel = _np_block_relu_kernel_single_k
        dims = ("parallel", "parallel")
    else:
        grid = (grid_m, grid_n, grid_k)
        in_specs = [
            pl.BlockSpec((tm, tk), lambda i, j, k: (i, k)),
            pl.BlockSpec((tk, tn), lambda i, j, k: (k, j)),
        ]
        out_specs = pl.BlockSpec((tm, tn), lambda i, j, k: (i, j))
        scratch_shapes = [pltpu.VMEM((tm, tn), jnp.float32)]
        kernel = _np_block_relu_kernel_multi_k
        dims = ("parallel", "parallel", "arbitrary")

    out2d = pl.pallas_call(
        kernel,
        out_shape=jax.ShapeDtypeStruct((M, Nout), out_dtype),
        grid_spec=pltpu.PrefetchScalarGridSpec(
            num_scalar_prefetch=0,
            grid=grid,
            in_specs=in_specs,
            out_specs=out_specs,
            scratch_shapes=scratch_shapes,
        ),
        compiler_params=pltpu.CompilerParams(
            dimension_semantics=dims,
            vmem_limit_bytes=vmem_limit,
        ),
    )(x2d, w_t)

    if Nout != Cout:
        out2d = out2d[:, :Cout]
    return out2d.reshape(B, S, Cout)


def reference(x, weight):
    # Pure-JAX reference of the PyTorch forward (module defaults).
    y = jnp.maximum(jnp.einsum("bsi,oi->bso", x, weight), 0.0)
    # permute(0,2,1)[:,:,:,None] ... [:,:,:,0].permute(0,2,1) == identity
    return y


if __name__ == "__main__":
    key = jax.random.PRNGKey(0)
    k1, k2, k3, k4 = jax.random.split(key, 4)

    def make(B, S, Cin, Cout, kx, kw):
        xs = jax.random.normal(kx, (B, S, Cin), dtype=jnp.float32)
        bound = 1.0 / (Cin ** 0.5)
        ws = jax.random.uniform(kw, (Cout, Cin), dtype=jnp.float32,
                                minval=-bound, maxval=bound)
        return xs, ws

    # 1) Small ragged-Cout shape (unpadded masked-store path, single K step).
    x, w = make(2, 8, 32, 32, k1, k2)
    out = jax.block_until_ready(np_block_relu2d(x, w))
    ref = reference(x, w)
    assert out.shape == ref.shape, (out.shape, ref.shape)
    assert jnp.allclose(out, ref, atol=1e-5, rtol=1e-5), "mismatch (test 1)"

    # 2) Lane-aligned Cout with M split across >= 2 tiles (lane-dense stores,
    #    partial trailing M block, megacore-friendly grid).
    x, w = make(2, 200, 96, 256, k3, k4)
    out = jax.block_until_ready(np_block_relu2d(x, w))
    ref = reference(x, w)
    assert out.shape == ref.shape, (out.shape, ref.shape)
    assert jnp.allclose(out, ref, atol=1e-4, rtol=1e-4), "mismatch (test 2)"

    # 3) Exercise the K-tiled accumulator path at a small shape.
    x, w = make(2, 16, 256, 32, k1, k3)
    out = jax.block_until_ready(np_block_relu2d(x, w, tile_k=128))
    ref = reference(x, w)
    assert out.shape == ref.shape, (out.shape, ref.shape)
    assert jnp.allclose(out, ref, atol=1e-4, rtol=1e-4), "mismatch (test 3)"

    print("KERNEL_OK")
</pallas_src>

<mosaic_0001>
module attributes {stable_mosaic.version = 11 : i64} {
  func.func @_np_block_relu_kernel_single_k(%arg0: i32, %arg1: i32, %arg2: memref<16x32xf32, #tpu.memory_space<vmem>>, %arg3: memref<32x32xf32, #tpu.memory_space<vmem>>, %arg4: memref<16x32xf32, #tpu.memory_space<vmem>>) attributes {dimension_semantics = [#tpu.dimension_semantics<parallel>, #tpu.dimension_semantics<parallel>], iteration_bounds = array<i64: 1, 1>, scalar_prefetch = 0 : i64, scratch_operands = 0 : i64, tpu.core_type = #tpu.core_type<tc>, window_params = [{transform_indices = @transform_0, window_bounds = array<i64: 16, 32>}, {transform_indices = @transform_1, window_bounds = array<i64: 32, 32>}, {transform_indices = @transform_2, window_bounds = array<i64: 16, 32>}]} {
    %c0 = arith.constant 0 : index
    %c0_0 = arith.constant 0 : index
    %0 = vector.load %arg2[%c0, %c0_0] : memref<16x32xf32, #tpu.memory_space<vmem>>, vector<16x32xf32>
    %c0_1 = arith.constant 0 : index
    %c0_2 = arith.constant 0 : index
    %1 = vector.load %arg3[%c0_1, %c0_2] : memref<32x32xf32, #tpu.memory_space<vmem>>, vector<32x32xf32>
    %cst = arith.constant dense<0.000000e+00> : vector<16x32xf32>
    %2 = tpu.matmul %0, %1, %cst {dimension_numbers = #tpu.dot_dimension_numbers<[1], [0], [0], [1], [0, 0, 1, 1], [], []>} : vector<16x32xf32>, vector<32x32xf32>, vector<16x32xf32> -> vector<16x32xf32>
    %cst_3 = arith.constant 0.000000e+00 : f32
    %3 = vector.broadcast %cst_3 : f32 to vector<16x32xf32>
    %4 = arith.maximumf %2, %3 : vector<16x32xf32>
    %c0_4 = arith.constant 0 : index
    %c0_5 = arith.constant 0 : index
    %5 = vector.load %arg4[%c0_4, %c0_5] : memref<16x32xf32, #tpu.memory_space<vmem>>, vector<16x32xf32>
    tpu.vector_store %arg4[%c0_4, %c0_5], %4 {strides = array<i32>} : memref<16x32xf32, #tpu.memory_space<vmem>>, vector<16x32xf32>,
    return
  }
  func.func @transform_0(%arg0: i32, %arg1: i32) -> (i32, i32) {
    %c0_i32 = arith.constant 0 : i32
    %c0_i32_0 = arith.constant 0 : i32
    return %arg0, %c0_i32 : i32, i32
  }
  func.func @transform_1(%arg0: i32, %arg1: i32) -> (i32, i32) {
    %c0_i32 = arith.constant 0 : i32
    %c0_i32_0 = arith.constant 0 : i32
    return %c0_i32, %arg1 : i32, i32
  }
  func.func @transform_2(%arg0: i32, %arg1: i32) -> (i32, i32) {
    %c0_i32 = arith.constant 0 : i32
    return %arg0, %arg1 : i32, i32
  }
}

</mosaic_0001>

<llo_original>
// kernel: np_block_relu2d.1
$region0: #{np_block_relu2d.1}
  #allocation0 [shape = 'u32[]', space=smem, size = 0x4, offset = 0x4, fixed_abs, tag = 'smem constant byte address 0x4 - core index']
  #allocation1 [shape = 'u32[144,128]{1,0:T(1,128)}', space=vmem, size = 0x12000, scoped, tag = 'internal scratch']
  %s0 = inlined_call_operand.vmem [shape: f32[16,32], index: 0, kind: input, shape index: {}]
  %s1 = inlined_call_operand.vmem [shape: f32[32,32], index: 1, kind: input, shape index: {}]
  %s2 = inlined_call_operand.hbm [shape: f32[16,32], index: 2, kind: output, shape index: {}]
  %s3 = sld [smem:[#allocation0]]
  $region18: #{np_block_relu2d.1} parent=0
    _
  %s5 = ssub.s32 1, %s3
  %s6 = scalar_select 0, %s5, %s3
  $region1: #{np_block_relu2d.1} parent=0
    #allocation2 [shape = 'u8[8192]{0}', space=vmem, size = 0x2000, scoped, tag = 'output window, operand 0, single buffered']
    #allocation3 [shape = 's32[1]{0}', space=sflag, size = 0x4, scoped, tag = 'scoped memory for np_block_relu2d.1']
    %7 = vsyncpa [#allocation3], 0
    // Predicated region
    $region2: #{np_block_relu2d.1} parent=1 // pred_check
      _
    $region3: #{np_block_relu2d.1} parent=1 // pred_check_branch
      %9 = sbr.rel (0) target = $region5
    $region4: #{np_block_relu2d.1} parent=1 // pred_region
      _
    $region5: #{np_block_relu2d.1} parent=1 // pred_fallthru
      _
    // Predicated region
    $region6: #{np_block_relu2d.1} parent=1 // pred_check
      _
    $region7: #{np_block_relu2d.1} parent=1 // pred_check_branch
      %11 = sbr.rel (0) target = $region9
    $region8: #{np_block_relu2d.1} parent=1 // pred_region
      _
    $region9: #{np_block_relu2d.1} parent=1 // pred_fallthru
      _
    %v12 = vld [vmem:[%s0] sm:$0xff]
    %v13 = vld [vmem:[%s0 + $0x8] sm:$0xff]
    %v14 = vld [vmem:[%s1] sm:$0xff]
    %v15 = vld [vmem:[%s1 + $0x8] sm:$0xff]
    %v16 = vld [vmem:[%s1 + $0x10] sm:$0xff]
    %v17 = vld [vmem:[%s1 + $0x18] sm:$0xff]
    %vm18 = vcmask 261120
    %v20 = vsel %vm18, %v12, 0
    %v23 = vsel %vm18, %v13, 0
    %25 = vmatprep.subr.mxu0 0.0
    %26 = vmatpush1.msra.mxu0 0.0
    %27 = vmatprep.subr.mxu0 0.0
    %28 = vmatpush1.msra.mxu0 0.0
    %29 = vmatprep.subr.mxu0 0.0
    %30 = vmatpush1.msra.mxu0 0.0
    %31 = vmatprep.subr.mxu0 0.0
    %32 = vmatpush1.msra.mxu0 0.0
    %33 = vmatprep.subr.mxu0 0.0
    %34 = vmatpush1.msra.mxu0 0.0
    %35 = vmatprep.subr.mxu0 0.0
    %36 = vmatpush1.msra.mxu0 0.0
    %37 = vmatprep.subr.mxu0 0.0
    %38 = vmatpush1.msra.mxu0 0.0
    %39 = vmatprep.subr.mxu0 0.0
    %40 = vmatpush1.msra.mxu0 0.0
    %41 = vmatprep.subr.mxu0 0.0
    %42 = vmatpush1.msra.mxu0 0.0
    %43 = vmatprep.subr.mxu0 0.0
    %44 = vmatpush1.msra.mxu0 0.0
    %45 = vmatprep.subr.mxu0 0.0
    %46 = vmatpush1.msra.mxu0 0.0
    %47 = vmatprep.subr.mxu0 0.0
    %48 = vmatpush1.msra.mxu0 0.0
    %49 = vmatprep.subr.mxu0 0.0
    %50 = vmatpush1.msra.mxu0 %v17
    %51 = vmatprep.subr.mxu0 0.0
    %52 = vmatpush1.msra.mxu0 %v16
    %53 = vmatprep.subr.mxu0 0.0
    %54 = vmatpush1.msra.mxu0 %v15
    %55 = vmatprep.subr.mxu0 0.0
    %56 = vmatpush1.msra.mxu0 %v14
    %57 = vmatprep.subr.mxu0 0.0
    %58 = vmatpush2.msra.mxu0 0.0
    %59 = vmatprep.subr.mxu0 0.0
    %60 = vmatpush2.msra.mxu0 0.0
    %61 = vmatprep.subr.mxu0 0.0
    %62 = vmatpush2.msra.mxu0 0.0
    %63 = vmatprep.subr.mxu0 0.0
    %64 = vmatpush2.msra.mxu0 0.0
    %65 = vmatprep.subr.mxu0 0.0
    %66 = vmatpush2.msra.mxu0 0.0
    %67 = vmatprep.subr.mxu0 0.0
    %68 = vmatpush2.msra.mxu0 0.0
    %69 = vmatprep.subr.mxu0 0.0
    %70 = vmatpush2.msra.mxu0 0.0
    %71 = vmatprep.subr.mxu0 0.0
    %72 = vmatpush2.msra.mxu0 0.0
    %73 = vmatprep.subr.mxu0 0.0
    %74 = vmatpush2.msra.mxu0 0.0
    %75 = vmatprep.subr.mxu0 0.0
    %76 = vmatpush2.msra.mxu0 0.0
    %77 = vmatprep.subr.mxu0 0.0
    %78 = vmatpush2.msra.mxu0 0.0
    %79 = vmatprep.subr.mxu0 0.0
    %80 = vmatpush2.msra.mxu0 0.0
    %81 = vmatprep.subr.mxu0 0.0
    %82 = vmatpush2.msra.mxu0 0.0
    %83 = vmatprep.subr.mxu0 0.0
    %84 = vmatpush2.msra.mxu0 0.0
    %85 = vmatprep.subr.mxu0 0.0
    %86 = vmatpush2.msra.mxu0 0.0
    %87 = vmatprep.subr.mxu0 0.0
    %88 = vmatpush2.msra.mxu0 0.0
    %89 = vmatprep.mubr.f32.mxu0 0.0
    %90 = vmatmul.mubr.f32.gmra.mxu0 %v20
    %v91 = vpop.f32.mrf.mxu0
    %v92 = vadd.f32 0.0, %v91
    %v93 = vpop.f32.mrf.mxu0
    %94 = vmatprep.mubr.f32.mxu0 0.0
    %95 = vmatmul.mubr.f32.gmra.mxu0 %v23
    %v96 = vpop.f32.mrf.mxu0
    %v97 = vadd.f32 0.0, %v96
    %v98 = vpop.f32.mrf.mxu0
    %99 = vdwg.mxu0
    %v100 = vmax.f32 %v92, 0.0
    %v101 = vmax.f32 %v97, 0.0
    %102 = vst.msk [vmem:[#allocation2] sm:$0xff] %vm18, %v100
    %103 = vst.msk [vmem:[#allocation2 + $0x8] sm:$0xff] %vm18, %v101
    // Predicated region
    $region10: #{np_block_relu2d.1} parent=1 // pred_check
      _
    $region11: #{np_block_relu2d.1} parent=1 // pred_check_branch
      %105 = sbr.rel (0) target = $region13
    $region12: #{np_block_relu2d.1} parent=1 // pred_region
      %s107 = ssub.s32 256, 256
      %108 = vsyncadd [#allocation3], %s107
      %s109 = sshll.u32 [#allocation2], 4
      %s110 = int_to_ptr.vmem [resolvable:$true] %s109
      %115 = dma.vmem_to_hbm [thread:$0]  %s110, 256, %s2, [#allocation3], 128, 128, 8
    $region13: #{np_block_relu2d.1} parent=1 // pred_fallthru
      _
    // Predicated region
    $region14: #{np_block_relu2d.1} parent=1 // pred_check
      _
    $region15: #{np_block_relu2d.1} parent=1 // pred_check_branch
      %117 = sbr.rel (0) target = $region17
    $region16: #{np_block_relu2d.1} parent=1 // pred_region
      %118 = dma.done [#allocation3], 256
    $region17: #{np_block_relu2d.1} parent=1 // pred_fallthru
      _
    %119 = vsyncpa [#allocation3], 1

</llo_original>
